<compile_context>
chip_gen: v7x
topology: tpu7x:2x2x1
jax: 0.10.0
libtpu: 0.0.40
codegen_flags: <defaults>
</compile_context>

<pallas_src>
import math

import jax
import jax.numpy as jnp
from jax.experimental import pallas as pl
from jax.experimental.pallas import tpu as pltpu

_NEG_INF = -1e30                      # finite mask value (avoids inf-inf NaNs)


def _round_up(x, m):
    return (x + m - 1) // m * m


def _vmem_limit_bytes():
    # ~75% of physical VMEM: ~96 MiB on v5e/v6e (128 MiB), ~48 MiB on v7x (64 MiB/TC)
    # so the compiler keeps headroom for internal scratch/semaphores.
    try:
        cap = pltpu.get_tpu_info().vmem_capacity_bytes
    except Exception:
        cap = 64 * 1024 * 1024
    return min(int(cap) * 3 // 4, 96 * 1024 * 1024)


# --------------------------------------------------------------------------- pass 1
def _proj_kernel(x_ref, w_ref, a1_ref, a2_ref, h_ref, f1_ref, f2_ref):
    # h = x @ W — x/W arrive already in bf16, f32 accumulation on the MXU.
    h = jnp.dot(x_ref[...], w_ref[...], preferred_element_type=jnp.float32)  # (tq, Fp)
    # f1/f2 on the VPU + lane reduce; an (Fp,1) matmul would waste the MXU.
    f1_ref[...] = jnp.sum(h * a1_ref[...], axis=-1, keepdims=True)
    f2_ref[...] = jnp.sum(h * a2_ref[...], axis=-1, keepdims=True)
    h_ref[...] = h.astype(jnp.bfloat16)                                      # pass-2 values


# --------------------------------------------------------------------------- pass 2
def _make_attn_kernel(leaky_alpha, concat, tk):
    def attn_kernel(f1_ref, m_ref, f2_ref, h_ref, o_ref, l_sc):
        k = pl.program_id(1)

        @pl.when(k == 0)
        def _():
            l_sc[...] = jnp.zeros_like(l_sc)
            o_ref[...] = jnp.zeros_like(o_ref)        # resident accumulator across k

        # f2 is resident as one lane-dense (1, Np) row (constant index_map ⇒ single DMA
        # per query tile); slice the current key tile in-VMEM instead of per-step DMAs.
        off = pl.multiple_of(k * tk, 128)
        f2 = f2_ref[:, pl.ds(off, tk)]                # (1, tk); padded keys already -1e30
        e = f1_ref[...] + f2                          # (tq,1)+(1,tk) -> (tq,tk)
        e = jnp.where(e > 0, e, leaky_alpha * e)

        # m_ref holds the exact row max (rank-1 + monotone logits), so no online rescale:
        # exp(e - m) <= 1 for valid keys and underflows to 0 for masked keys.
        p = jnp.exp(e - m_ref[...])                   # (tq, tk) f32
        l_sc[...] += jnp.sum(p, axis=-1, keepdims=True)
        o_ref[...] += jnp.dot(p.astype(jnp.bfloat16), h_ref[...],
                              preferred_element_type=jnp.float32)

        @pl.when(k == pl.num_programs(1) - 1)
        def _():
            inv_l = pl.reciprocal(l_sc[...], approx=True)   # EUP slot, ~free
            feat = o_ref[...] * inv_l
            if concat:
                # ELU; clamp before exp so the discarded branch never produces inf.
                feat = jnp.where(feat > 0, feat,
                                 jnp.exp(jnp.minimum(feat, 0.0)) - 1.0)
            o_ref[...] = feat                               # lane-dense store

    return attn_kernel


# --------------------------------------------------------------------------- wrapper
def graph_attention_layer(x, W, a, *, leaky_alpha=0.2, concat=True, tq=512, tk=512):
    """x: (N, Fin), W: (Fin, Fout), a: (2*Fout, 1). Returns (N, Fout) float32."""
    N, Fin = x.shape
    Fout = W.shape[1]

    fin_p = _round_up(Fin, 128)            # MXU-friendly contraction dim
    fp = _round_up(Fout, 128)              # lane-dense value / output dim

    np_min = _round_up(N, 128)
    tq = min(tq, np_min)                   # query tile (large: fewer full sweeps of h)
    tk = min(tk, np_min)                   # key tile (decoupled from tq)
    np_ = _round_up(N, math.lcm(tq, tk))
    # NOTE(v7x megacore): for medium graphs prefer np_//tq >= 2 so both TensorCores
    # get query tiles; for tiny graphs (np_ == 128) a 1-tile grid is unavoidable.

    vmem_limit = _vmem_limit_bytes()

    # Zero-pad once in the wrapper; cast x/W to bf16 here (halves pass-1 HBM bytes).
    x_p = jnp.zeros((np_, fin_p), jnp.bfloat16).at[:N, :Fin].set(x.astype(jnp.bfloat16))
    w_p = jnp.zeros((fin_p, fp), jnp.bfloat16).at[:Fin, :Fout].set(W.astype(jnp.bfloat16))
    a1 = jnp.zeros((1, fp), jnp.float32).at[0, :Fout].set(a[:Fout, 0])
    a2 = jnp.zeros((1, fp), jnp.float32).at[0, :Fout].set(a[Fout:, 0])

    # ---- pass 1: projection + attention logits (h computed once, kept in HBM) ----
    h_bf, f1, f2 = pl.pallas_call(
        _proj_kernel,
        out_shape=(jax.ShapeDtypeStruct((np_, fp), jnp.bfloat16),
                   jax.ShapeDtypeStruct((np_, 1), jnp.float32),
                   jax.ShapeDtypeStruct((np_, 1), jnp.float32)),
        grid=(np_ // tq,),
        in_specs=[pl.BlockSpec((tq, fin_p), lambda i: (i, 0)),
                  pl.BlockSpec((fin_p, fp), lambda i: (0, 0)),
                  pl.BlockSpec((1, fp), lambda i: (0, 0)),
                  pl.BlockSpec((1, fp), lambda i: (0, 0))],
        out_specs=(pl.BlockSpec((tq, fp), lambda i: (i, 0)),
                   pl.BlockSpec((tq, 1), lambda i: (i, 0)),
                   pl.BlockSpec((tq, 1), lambda i: (i, 0))),
        compiler_params=pltpu.CompilerParams(
            dimension_semantics=("parallel",),
            vmem_limit_bytes=vmem_limit),
    )(x_p, w_p, a1, a2)

    # ---- tiny wrapper-side O(N) relayout / masking / exact row max -----------------
    # Key-side logits as a lane-dense (1, Np) row, with padded keys pre-masked.
    f2_row = f2.reshape(1, np_)
    valid = (jnp.arange(np_) < N)[None, :]
    f2_row = jnp.where(valid, f2_row, _NEG_INF)
    # Exact per-row softmax max: m_i = leakyrelu(f1_i + max_j f2_j)  (monotone + rank-1).
    f2_max = jnp.max(f2_row)                       # scalar (max over valid keys)
    em = f1 + f2_max                               # (Np, 1)
    m = jnp.where(em > 0, em, leaky_alpha * em)    # (Np, 1) f32

    # ---- pass 2: flash-style attention without online rescale ----------------------
    attn_kernel = _make_attn_kernel(leaky_alpha, concat, tk)
    out_p = pl.pallas_call(
        attn_kernel,
        out_shape=jax.ShapeDtypeStruct((np_, fp), jnp.float32),
        grid=(np_ // tq, np_ // tk),
        in_specs=[pl.BlockSpec((tq, 1), lambda i, k: (i, 0)),    # f1: query-row logits
                  pl.BlockSpec((tq, 1), lambda i, k: (i, 0)),    # m : exact row max
                  pl.BlockSpec((1, np_), lambda i, k: (0, 0)),   # f2: full key row, resident
                  pl.BlockSpec((tk, fp), lambda i, k: (k, 0))],  # h : value rows (bf16)
        out_specs=pl.BlockSpec((tq, fp), lambda i, k: (i, 0)),   # resident f32 accumulator
        scratch_shapes=[pltpu.VMEM((tq, 1), jnp.float32)],       # l (softmax denom)
        compiler_params=pltpu.CompilerParams(
            dimension_semantics=("parallel", "arbitrary"),
            vmem_limit_bytes=vmem_limit),
    )(f1, m, f2_row, h_bf)

    return out_p[:N, :Fout]


# --------------------------------------------------------------------------- reference
def _reference(x, W, a, leaky_alpha=0.2, concat=True):
    """Pure-JAX reference mirroring the PyTorch forward (eval mode), all f32."""
    h = x @ W
    N, Fout = h.shape
    a_input = jnp.concatenate(
        [jnp.repeat(h, N, axis=0), jnp.tile(h, (N, 1))], axis=1
    ).reshape(N, N, 2 * Fout)
    e = (a_input @ a).squeeze(2)
    e = jnp.where(e > 0, e, leaky_alpha * e)
    att = jax.nn.softmax(e, axis=1)
    feat = att @ h
    return jax.nn.elu(feat) if concat else feat


def _xavier_uniform(key, shape, gain):
    fan_in, fan_out = shape[0], shape[1]
    bound = gain * math.sqrt(6.0 / (fan_in + fan_out))
    return jax.random.uniform(key, shape, jnp.float32, -bound, bound)


if __name__ == "__main__":
    N = 8            # number of graph nodes
    in_features = 16
    out_features = 32
    alpha = 0.2      # LeakyReLU slope
    gain = 1.414

    key = jax.random.PRNGKey(0)
    kx, kw, ka = jax.random.split(key, 3)

    x = jax.random.normal(kx, (N, in_features), jnp.float32)
    W = _xavier_uniform(kw, (in_features, out_features), gain)
    a = _xavier_uniform(ka, (2 * out_features, 1), gain)

    out = graph_attention_layer(x, W, a, leaky_alpha=alpha, concat=True)
    out = jax.block_until_ready(out)

    ref = _reference(x, W, a, leaky_alpha=alpha, concat=True)
    assert out.shape == (N, out_features)
    # Tolerance reflects intentional bf16 MXU inputs (f32 accumulation) and the
    # approximate (EUP) reciprocal in the softmax finalize.
    assert jnp.allclose(out, ref, atol=1e-1, rtol=1e-1), "mismatch vs reference"

    print("KERNEL_OK")
</pallas_src>

<mosaic_0001>
module attributes {stable_mosaic.version = 11 : i64} {
  func.func @_proj_kernel(%arg0: i32, %arg1: memref<128x128xbf16, #tpu.memory_space<vmem>>, %arg2: memref<128x128xbf16, #tpu.memory_space<vmem>>, %arg3: memref<1x128xf32, #tpu.memory_space<vmem>>, %arg4: memref<1x128xf32, #tpu.memory_space<vmem>>, %arg5: memref<128x128xbf16, #tpu.memory_space<vmem>>, %arg6: memref<128x1xf32, #tpu.memory_space<vmem>>, %arg7: memref<128x1xf32, #tpu.memory_space<vmem>>) attributes {dimension_semantics = [#tpu.dimension_semantics<parallel>], iteration_bounds = array<i64: 1>, scalar_prefetch = 0 : i64, scratch_operands = 0 : i64, tpu.core_type = #tpu.core_type<tc>, window_params = [{transform_indices = @transform_0, window_bounds = array<i64: 128, 128>}, {pipeline_mode = #tpu.pipeline_mode<synchronous>, transform_indices = @transform_1, window_bounds = array<i64: 128, 128>}, {pipeline_mode = #tpu.pipeline_mode<synchronous>, transform_indices = @transform_2, window_bounds = array<i64: 1, 128>}, {pipeline_mode = #tpu.pipeline_mode<synchronous>, transform_indices = @transform_3, window_bounds = array<i64: 1, 128>}, {transform_indices = @transform_4, window_bounds = array<i64: 128, 128>}, {transform_indices = @transform_5, window_bounds = array<i64: 128, 1>}, {transform_indices = @transform_6, window_bounds = array<i64: 128, 1>}]} {
    %c0 = arith.constant 0 : index
    %c0_0 = arith.constant 0 : index
    %0 = vector.load %arg1[%c0, %c0_0] : memref<128x128xbf16, #tpu.memory_space<vmem>>, vector<128x128xbf16>
    %c0_1 = arith.constant 0 : index
    %c0_2 = arith.constant 0 : index
    %1 = vector.load %arg2[%c0_1, %c0_2] : memref<128x128xbf16, #tpu.memory_space<vmem>>, vector<128x128xbf16>
    %cst = arith.constant dense<0.000000e+00> : vector<128x128xf32>
    %2 = tpu.matmul %0, %1, %cst {dimension_numbers = #tpu.dot_dimension_numbers<[1], [0], [0], [1], [0, 0, 1, 1], [], []>} : vector<128x128xbf16>, vector<128x128xbf16>, vector<128x128xf32> -> vector<128x128xf32>
    %c0_3 = arith.constant 0 : index
    %c0_4 = arith.constant 0 : index
    %3 = vector.load %arg3[%c0_3, %c0_4] : memref<1x128xf32, #tpu.memory_space<vmem>>, vector<1x128xf32>
    %4 = vector.broadcast %3 : vector<1x128xf32> to vector<128x128xf32>
    %5 = arith.mulf %2, %4 : vector<128x128xf32>
    %cst_5 = arith.constant dense<0.000000e+00> : vector<128xf32>
    %6 = vector.multi_reduction <add>, %5, %cst_5 [1] : vector<128x128xf32> to vector<128xf32>
    %7 = vector.shape_cast %6 : vector<128xf32> to vector<128x1xf32>
    %c0_6 = arith.constant 0 : index
    %c0_7 = arith.constant 0 : index
    %8 = vector.load %arg6[%c0_6, %c0_7] : memref<128x1xf32, #tpu.memory_space<vmem>>, vector<128x1xf32>
    tpu.vector_store %arg6[%c0_6, %c0_7], %7 {strides = array<i32>} : memref<128x1xf32, #tpu.memory_space<vmem>>, vector<128x1xf32>,
    %c0_8 = arith.constant 0 : index
    %c0_9 = arith.constant 0 : index
    %9 = vector.load %arg4[%c0_8, %c0_9] : memref<1x128xf32, #tpu.memory_space<vmem>>, vector<1x128xf32>
    %10 = vector.broadcast %9 : vector<1x128xf32> to vector<128x128xf32>
    %11 = arith.mulf %2, %10 : vector<128x128xf32>
    %cst_10 = arith.constant dense<0.000000e+00> : vector<128xf32>
    %12 = vector.multi_reduction <add>, %11, %cst_10 [1] : vector<128x128xf32> to vector<128xf32>
    %13 = vector.shape_cast %12 : vector<128xf32> to vector<128x1xf32>
    %c0_11 = arith.constant 0 : index
    %c0_12 = arith.constant 0 : index
    %14 = vector.load %arg7[%c0_11, %c0_12] : memref<128x1xf32, #tpu.memory_space<vmem>>, vector<128x1xf32>
    tpu.vector_store %arg7[%c0_11, %c0_12], %13 {strides = array<i32>} : memref<128x1xf32, #tpu.memory_space<vmem>>, vector<128x1xf32>,
    %15 = arith.truncf %2 : vector<128x128xf32> to vector<128x128xbf16>
    %c0_13 = arith.constant 0 : index
    %c0_14 = arith.constant 0 : index
    %16 = vector.load %arg5[%c0_13, %c0_14] : memref<128x128xbf16, #tpu.memory_space<vmem>>, vector<128x128xbf16>
    tpu.vector_store %arg5[%c0_13, %c0_14], %15 {strides = array<i32>} : memref<128x128xbf16, #tpu.memory_space<vmem>>, vector<128x128xbf16>,
    return
  }
  func.func @transform_0(%arg0: i32) -> (i32, i32) {
    %c0_i32 = arith.constant 0 : i32
    %c0_i32_0 = arith.constant 0 : i32
    return %arg0, %c0_i32 : i32, i32
  }
  func.func @transform_1(%arg0: i32) -> (i32, i32) {
    %c0_i32 = arith.constant 0 : i32
    %c0_i32_0 = arith.constant 0 : i32
    %c0_i32_1 = arith.constant 0 : i32
    return %c0_i32, %c0_i32_0 : i32, i32
  }
  func.func @transform_2(%arg0: i32) -> (i32, i32) {
    %c0_i32 = arith.constant 0 : i32
    %c0_i32_0 = arith.constant 0 : i32
    %c0_i32_1 = arith.constant 0 : i32
    return %c0_i32, %c0_i32_0 : i32, i32
  }
  func.func @transform_3(%arg0: i32) -> (i32, i32) {
    %c0_i32 = arith.constant 0 : i32
    %c0_i32_0 = arith.constant 0 : i32
    %c0_i32_1 = arith.constant 0 : i32
    return %c0_i32, %c0_i32_0 : i32, i32
  }
  func.func @transform_4(%arg0: i32) -> (i32, i32) {
    %c0_i32 = arith.constant 0 : i32
    %c0_i32_0 = arith.constant 0 : i32
    return %arg0, %c0_i32 : i32, i32
  }
  func.func @transform_5(%arg0: i32) -> (i32, i32) {
    %c0_i32 = arith.constant 0 : i32
    %c0_i32_0 = arith.constant 0 : i32
    return %arg0, %c0_i32 : i32, i32
  }
  func.func @transform_6(%arg0: i32) -> (i32, i32) {
    %c0_i32 = arith.constant 0 : i32
    %c0_i32_0 = arith.constant 0 : i32
    return %arg0, %c0_i32 : i32, i32
  }
}

</mosaic_0001>

<llo_original>
// kernel: tpu_custom_call.1
$region0: #{tpu_custom_call.1}
  #allocation0 [shape = 'u32[]', space=smem, size = 0x4, offset = 0x4, fixed_abs, tag = 'smem constant byte address 0x4 - core index']
  #allocation1 [shape = 'u32[144,128]{1,0:T(1,128)}', space=vmem, size = 0x12000, scoped, tag = 'internal scratch']
  %s0 = inlined_call_operand.hbm [shape: bf16[128,128], index: 0, kind: input, shape index: {}]
  %s1 = inlined_call_operand.hbm [shape: bf16[128,128], index: 1, kind: input, shape index: {}]
  %s2 = inlined_call_operand.vmem [shape: f32[1,128], index: 2, kind: input, shape index: {}]
  %s3 = inlined_call_operand.vmem [shape: f32[1,128], index: 3, kind: input, shape index: {}]
  %s4 = inlined_call_operand.hbm [shape: bf16[128,128], index: 4, kind: output, shape index: {0}]
  %s5 = inlined_call_operand.vmem [shape: f32[128,1], index: 5, kind: output, shape index: {1}]
  %s6 = inlined_call_operand.vmem [shape: f32[128,1], index: 6, kind: output, shape index: {2}]
  %7 = xla_tuple %s4, %s5, %s6
  %s8 = sld [smem:[#allocation0]]
  $region50: #{tpu_custom_call.1} parent=0
    _
  %s10 = ssub.s32 1, %s8
  %s11 = scalar_select 0, %s10, %s8
  $region1: #{tpu_custom_call.1} parent=0
    #allocation2 [shape = 'u8[32768]{0}', space=vmem, size = 0x8000, scoped, tag = 'input window, operand 0, single buffered']
    #allocation3 [shape = 's32[1]{0}', space=sflag, size = 0x4, scoped, tag = 'scoped memory for tpu_custom_call.1']
    #allocation4 [shape = 's32[1]{0}', space=sflag, size = 0x4, scoped, tag = 'scoped memory for tpu_custom_call.1']
    #allocation5 [shape = 'u8[32768]{0}', space=vmem, size = 0x8000, scoped, tag = 'input window, operand 1, single buffered']
    #allocation6 [shape = 's32[1]{0}', space=sflag, size = 0x4, scoped, tag = 'scoped memory for tpu_custom_call.1']
    #allocation7 [shape = 'u8[32768]{0}', space=vmem, size = 0x8000, scoped, tag = 'output window, operand 0, single buffered']
    %12 = vsyncpa [#allocation3], 0
    %13 = vsyncpa [#allocation6], 0
    %14 = vsyncpa [#allocation4], 0
    // Predicated region
    $region2: #{tpu_custom_call.1} parent=1 // pred_check
      _
    $region3: #{tpu_custom_call.1} parent=1 // pred_check_branch
      %16 = sbr.rel (0) target = $region5
    $region4: #{tpu_custom_call.1} parent=1 // pred_region
      %s18 = ssub.s32 1024, 1024
      %19 = vsyncadd [#allocation3], %s18
      %s20 = sshll.u32 [#allocation2], 4
      %s21 = int_to_ptr.vmem [resolvable:$true] %s20
      %26 = dma.hbm_to_vmem [thread:$0]  %s0, 1024, %s21, [#allocation3], 64, 64, 4
    $region5: #{tpu_custom_call.1} parent=1 // pred_fallthru
      _
    // Predicated region
    $region6: #{tpu_custom_call.1} parent=1 // pred_check
      _
    $region7: #{tpu_custom_call.1} parent=1 // pred_check_branch
      %28 = sbr.rel (0) target = $region9
    $region8: #{tpu_custom_call.1} parent=1 // pred_region
      %s30 = ssub.s32 1024, 1024
      %31 = vsyncadd [#allocation6], %s30
      %s32 = sshll.u32 [#allocation5], 4
      %s33 = int_to_ptr.vmem [resolvable:$true] %s32
      %38 = dma.hbm_to_vmem [thread:$0]  %s1, 1024, %s33, [#allocation6], 64, 64, 4
    $region9: #{tpu_custom_call.1} parent=1 // pred_fallthru
      _
    // Predicated region
    $region10: #{tpu_custom_call.1} parent=1 // pred_check
      _
    $region11: #{tpu_custom_call.1} parent=1 // pred_check_branch
      %40 = sbr.rel (0) target = $region13
    $region12: #{tpu_custom_call.1} parent=1 // pred_region
      _
    $region13: #{tpu_custom_call.1} parent=1 // pred_fallthru
      _
    // Predicated region
    $region14: #{tpu_custom_call.1} parent=1 // pred_check
      _
    $region15: #{tpu_custom_call.1} parent=1 // pred_check_branch
      %42 = sbr.rel (0) target = $region17
    $region16: #{tpu_custom_call.1} parent=1 // pred_region
      _
    $region17: #{tpu_custom_call.1} parent=1 // pred_fallthru
      _
    // Predicated region
    $region18: #{tpu_custom_call.1} parent=1 // pred_check
      _
    $region19: #{tpu_custom_call.1} parent=1 // pred_check_branch
      %44 = sbr.rel (0) target = $region21
    $region20: #{tpu_custom_call.1} parent=1 // pred_region
      %45 = dma.done [#allocation3], 1024
    $region21: #{tpu_custom_call.1} parent=1 // pred_fallthru
      _
    // Predicated region
    $region22: #{tpu_custom_call.1} parent=1 // pred_check
      _
    $region23: #{tpu_custom_call.1} parent=1 // pred_check_branch
      %47 = sbr.rel (0) target = $region25
    $region24: #{tpu_custom_call.1} parent=1 // pred_region
      %48 = dma.done [#allocation6], 1024
    $region25: #{tpu_custom_call.1} parent=1 // pred_fallthru
      _
    %v50 = vld [vmem:[#allocation2] sm:$0xf]
    %v51 = vld [vmem:[#allocation2 + $0x4] sm:$0xf]
    %v52 = vld [vmem:[#allocation2 + $0x8] sm:$0xf]
    %v53 = vld [vmem:[#allocation2 + $0xc] sm:$0xf]
    %v54 = vld [vmem:[#allocation2 + $0x10] sm:$0xf]
    %v55 = vld [vmem:[#allocation2 + $0x14] sm:$0xf]
    %v56 = vld [vmem:[#allocation2 + $0x18] sm:$0xf]
    %v57 = vld [vmem:[#allocation2 + $0x1c] sm:$0xf]
    %v58 = vld [vmem:[#allocation2 + $0x20] sm:$0xf]
    %v59 = vld [vmem:[#allocation2 + $0x24] sm:$0xf]
    %v60 = vld [vmem:[#allocation2 + $0x28] sm:$0xf]
    %v61 = vld [vmem:[#allocation2 + $0x2c] sm:$0xf]
    %v62 = vld [vmem:[#allocation2 + $0x30] sm:$0xf]
    %v63 = vld [vmem:[#allocation2 + $0x34] sm:$0xf]
    %v64 = vld [vmem:[#allocation2 + $0x38] sm:$0xf]
    %v65 = vld [vmem:[#allocation2 + $0x3c] sm:$0xf]
    %v66 = vld [vmem:[#allocation5] sm:$0xf]
    %v67 = vld [vmem:[#allocation5 + $0x4] sm:$0xf]
    %v68 = vld [vmem:[#allocation5 + $0x8] sm:$0xf]
    %v69 = vld [vmem:[#allocation5 + $0xc] sm:$0xf]
    %v70 = vld [vmem:[#allocation5 + $0x10] sm:$0xf]
    %v71 = vld [vmem:[#allocation5 + $0x14] sm:$0xf]
    %v72 = vld [vmem:[#allocation5 + $0x18] sm:$0xf]
    %v73 = vld [vmem:[#allocation5 + $0x1c] sm:$0xf]
    %v74 = vld [vmem:[#allocation5 + $0x20] sm:$0xf]
    %v75 = vld [vmem:[#allocation5 + $0x24] sm:$0xf]
    %v76 = vld [vmem:[#allocation5 + $0x28] sm:$0xf]
    %v77 = vld [vmem:[#allocation5 + $0x2c] sm:$0xf]
    %v78 = vld [vmem:[#allocation5 + $0x30] sm:$0xf]
    %v79 = vld [vmem:[#allocation5 + $0x34] sm:$0xf]
    %v80 = vld [vmem:[#allocation5 + $0x38] sm:$0xf]
    %v81 = vld [vmem:[#allocation5 + $0x3c] sm:$0xf]
    %v98 = vunpack.c.l.b16 %v50
    %v99 = vunpack.c.l.b16 %v51
    %v100 = vunpack.c.l.b16 %v52
    %v101 = vunpack.c.l.b16 %v53
    %v102 = vunpack.c.l.b16 %v54
    %v103 = vunpack.c.l.b16 %v55
    %v104 = vunpack.c.l.b16 %v56
    %v105 = vunpack.c.l.b16 %v57
    %v106 = vunpack.c.l.b16 %v58
    %v107 = vunpack.c.l.b16 %v59
    %v108 = vunpack.c.l.b16 %v60
    %v109 = vunpack.c.l.b16 %v61
    %v110 = vunpack.c.l.b16 %v62
    %v111 = vunpack.c.l.b16 %v63
    %v112 = vunpack.c.l.b16 %v64
    %v113 = vunpack.c.l.b16 %v65
    %v114 = vpack.c.b16 %v99, %v98
    %v115 = vpack.c.b16 %v101, %v100
    %v116 = vpack.c.b16 %v103, %v102
    %v117 = vpack.c.b16 %v105, %v104
    %v118 = vpack.c.b16 %v107, %v106
    %v119 = vpack.c.b16 %v109, %v108
    %v120 = vpack.c.b16 %v111, %v110
    %v121 = vpack.c.b16 %v113, %v112
    %v146 = vunpack.c.l.b16 %v66
    %v147 = vunpack.c.l.b16 %v67
    %v148 = vunpack.c.l.b16 %v68
    %v149 = vunpack.c.l.b16 %v69
    %v150 = vunpack.c.l.b16 %v70
    %v151 = vunpack.c.l.b16 %v71
    %v152 = vunpack.c.l.b16 %v72
    %v153 = vunpack.c.l.b16 %v73
    %v154 = vunpack.c.l.b16 %v74
    %v155 = vunpack.c.l.b16 %v75
    %v156 = vunpack.c.l.b16 %v76
    %v157 = vunpack.c.l.b16 %v77
    %v158 = vunpack.c.l.b16 %v78
    %v159 = vunpack.c.l.b16 %v79
    %v160 = vunpack.c.l.b16 %v80
    %v161 = vunpack.c.l.b16 %v81
    %v162 = vpack.c.b16 %v147, %v146
    %v163 = vpack.c.b16 %v149, %v148
    %v164 = vpack.c.b16 %v151, %v150
    %v165 = vpack.c.b16 %v153, %v152
    %v166 = vpack.c.b16 %v155, %v154
    %v167 = vpack.c.b16 %v157, %v156
    %v168 = vpack.c.b16 %v159, %v158
    %v169 = vpack.c.b16 %v161, %v160
    %178 = vmatprep.subr.bf16.mxu0 0
    %179 = vmatpush1.bf16.msra.mxu0 %v162
    %180 = vmatprep.subr.bf16.mxu0 0
    %181 = vmatpush1.bf16.msra.mxu0 %v163
    %182 = vmatprep.subr.bf16.mxu0 0
    %183 = vmatpush1.bf16.msra.mxu0 %v164
    %184 = vmatprep.subr.bf16.mxu0 0
    %185 = vmatpush1.bf16.msra.mxu0 %v165
    %186 = vmatprep.subr.bf16.mxu0 0
    %187 = vmatpush1.bf16.msra.mxu0 %v166
    %188 = vmatprep.subr.bf16.mxu0 0
    %189 = vmatpush1.bf16.msra.mxu0 %v167
    %190 = vmatprep.subr.bf16.mxu0 0
    %191 = vmatpush1.bf16.msra.mxu0 %v168
    %192 = vmatprep.subr.bf16.mxu0 0
    %193 = vmatpush1.bf16.msra.mxu0 %v169
    %194 = vmatprep.subr.bf16.mxu0 0
    %195 = vmatpush1.bf16.msra.mxu0 0
    %196 = vmatprep.subr.bf16.mxu0 0
    %197 = vmatpush1.bf16.msra.mxu0 0
    %198 = vmatprep.subr.bf16.mxu0 0
    %199 = vmatpush1.bf16.msra.mxu0 0
    %200 = vmatprep.subr.bf16.mxu0 0
    %201 = vmatpush1.bf16.msra.mxu0 0
    %202 = vmatprep.subr.bf16.mxu0 0
    %203 = vmatpush1.bf16.msra.mxu0 0
    %204 = vmatprep.subr.bf16.mxu0 0
    %205 = vmatpush1.bf16.msra.mxu0 0
    %206 = vmatprep.subr.bf16.mxu0 0
    %207 = vmatpush1.bf16.msra.mxu0 0
    %208 = vmatprep.subr.bf16.mxu0 0
    %209 = vmatpush1.bf16.msra.mxu0 0
    %210 = vmatprep.mubr.bf16.mxu0 0
    %211 = vmatmul.mubr.bf16.gmra.mrb[0].mxu0 %v114
    %v212 = vpop.f32.mrb[0].mxu0
    %v213 = vadd.f32 0.0, %v212
    %v214 = vpop.f32.mrb[0].mxu0
    %v215 = vpop.f32.mrb[0].mxu0
    %v216 = vadd.f32 0.0, %v215
    %v217 = vpop.f32.mrb[0].mxu0
    %218 = vmatprep.mubr.bf16.mxu0 0
    %219 = vmatmul.mubr.bf16.gmra.mrb[0].mxu0 %v115
    %v220 = vpop.f32.mrb[0].mxu0
    %v221 = vadd.f32 0.0, %v220
    %v222 = vpop.f32.mrb[0].mxu0
    %v223 = vpop.f32.mrb[0].mxu0
    %v224 = vadd.f32 0.0, %v223
    %v225 = vpop.f32.mrb[0].mxu0
    %226 = vmatprep.mubr.bf16.mxu0 0
    %227 = vmatmul.mubr.bf16.gmra.mrb[0].mxu0 %v116
    %v228 = vpop.f32.mrb[0].mxu0
    %v229 = vadd.f32 0.0, %v228
    %v230 = vpop.f32.mrb[0].mxu0
    %v231 = vpop.f32.mrb[0].mxu0
    %v232 = vadd.f32 0.0, %v231
    %v233 = vpop.f32.mrb[0].mxu0
    %234 = vmatprep.mubr.bf16.mxu0 0
    %235 = vmatmul.mubr.bf16.gmra.mrb[0].mxu0 %v117
    %v236 = vpop.f32.mrb[0].mxu0
    %v237 = vadd.f32 0.0, %v236
    %v238 = vpop.f32.mrb[0].mxu0
    %v239 = vpop.f32.mrb[0].mxu0
    %v240 = vadd.f32 0.0, %v239
    %v241 = vpop.f32.mrb[0].mxu0
    %242 = vmatprep.mubr.bf16.mxu0 0
    %243 = vmatmul.mubr.bf16.gmra.mrb[0].mxu0 %v118
    %v244 = vpop.f32.mrb[0].mxu0
    %v245 = vadd.f32 0.0, %v244
    %v246 = vpop.f32.mrb[0].mxu0
    %v247 = vpop.f32.mrb[0].mxu0
    %v248 = vadd.f32 0.0, %v247
    %v249 = vpop.f32.mrb[0].mxu0
    %250 = vmatprep.mubr.bf16.mxu0 0
    %251 = vmatmul.mubr.bf16.gmra.mrb[0].mxu0 %v119
    %v252 = vpop.f32.mrb[0].mxu0
    %v253 = vadd.f32 0.0, %v252
    %v254 = vpop.f32.mrb[0].mxu0
    %v255 = vpop.f32.mrb[0].mxu0
    %v256 = vadd.f32 0.0, %v255
    %v257 = vpop.f32.mrb[0].mxu0
    %258 = vmatprep.mubr.bf16.mxu0 0
    %259 = vmatmul.mubr.bf16.gmra.mrb[0].mxu0 %v120
    %v260 = vpop.f32.mrb[0].mxu0
    %v261 = vadd.f32 0.0, %v260
    %v262 = vpop.f32.mrb[0].mxu0
    %v263 = vpop.f32.mrb[0].mxu0
    %v264 = vadd.f32 0.0, %v263
    %v265 = vpop.f32.mrb[0].mxu0
    %266 = vmatprep.mubr.bf16.mxu0 0
    %267 = vmatmul.mubr.bf16.gmra.mrb[0].mxu0 %v121
    %v268 = vpop.f32.mrb[0].mxu0
    %v269 = vadd.f32 0.0, %v268
    %v270 = vpop.f32.mrb[0].mxu0
    %v271 = vpop.f32.mrb[0].mxu0
    %v272 = vadd.f32 0.0, %v271
    %v273 = vpop.f32.mrb[0].mxu0
    %274 = vdwg.mxu0
    %v275 = vld [vmem:[%s2] sm:$0x1]
    %v277 = vlaneseq
    %v278 = vshrl.u32 %v277, 7
    %v279 = vsub.s32 0, %v278
    %v280 = vrot.slane %v275, %v279
    %v282 = vmul.f32 %v213, %v280
    %v283 = vmul.f32 %v216, %v280
    %v284 = vmul.f32 %v221, %v280
    %v285 = vmul.f32 %v224, %v280
    %v286 = vmul.f32 %v229, %v280
    %v287 = vmul.f32 %v232, %v280
    %v288 = vmul.f32 %v237, %v280
    %v289 = vmul.f32 %v240, %v280
    %v290 = vmul.f32 %v245, %v280
    %v291 = vmul.f32 %v248, %v280
    %v292 = vmul.f32 %v253, %v280
    %v293 = vmul.f32 %v256, %v280
    %v294 = vmul.f32 %v261, %v280
    %v295 = vmul.f32 %v264, %v280
    %v296 = vmul.f32 %v269, %v280
    %v297 = vmul.f32 %v272, %v280
    %298 = vadd.xlane.f32.xlu0 %v282
    %v299 = vpop.xlane.xlu0 %298
    %300 = vadd.xlane.f32.xlu0 %v283
    %v301 = vpop.xlane.xlu0 %300
    %302 = vadd.xlane.f32.xlu0 %v284
    %v303 = vpop.xlane.xlu0 %302
    %304 = vadd.xlane.f32.xlu0 %v285
    %v305 = vpop.xlane.xlu0 %304
    %306 = vadd.xlane.f32.xlu0 %v286
    %v307 = vpop.xlane.xlu0 %306
    %308 = vadd.xlane.f32.xlu0 %v287
    %v309 = vpop.xlane.xlu0 %308
    %310 = vadd.xlane.f32.xlu0 %v288
    %v311 = vpop.xlane.xlu0 %310
    %312 = vadd.xlane.f32.xlu0 %v289
    %v313 = vpop.xlane.xlu0 %312
    %314 = vadd.xlane.f32.xlu0 %v290
    %v315 = vpop.xlane.xlu0 %314
    %316 = vadd.xlane.f32.xlu0 %v291
    %v317 = vpop.xlane.xlu0 %316
    %318 = vadd.xlane.f32.xlu0 %v292
    %v319 = vpop.xlane.xlu0 %318
    %320 = vadd.xlane.f32.xlu0 %v293
    %v321 = vpop.xlane.xlu0 %320
    %322 = vadd.xlane.f32.xlu0 %v294
    %v323 = vpop.xlane.xlu0 %322
    %324 = vadd.xlane.f32.xlu0 %v295
    %v325 = vpop.xlane.xlu0 %324
    %326 = vadd.xlane.f32.xlu0 %v296
    %v327 = vpop.xlane.xlu0 %326
    %328 = vadd.xlane.f32.xlu0 %v297
    %v329 = vpop.xlane.xlu0 %328
    %vm330 = vcmask 7168
    %331 = vst.msk [vmem:[%s5] sm:$0xff] %vm330, %v299
    %332 = vst.msk [vmem:[%s5 + $0x8] sm:$0xff] %vm330, %v301
    %333 = vst.msk [vmem:[%s5 + $0x10] sm:$0xff] %vm330, %v303
    %334 = vst.msk [vmem:[%s5 + $0x18] sm:$0xff] %vm330, %v305
    %335 = vst.msk [vmem:[%s5 + $0x20] sm:$0xff] %vm330, %v307
    %336 = vst.msk [vmem:[%s5 + $0x28] sm:$0xff] %vm330, %v309
    %337 = vst.msk [vmem:[%s5 + $0x30] sm:$0xff] %vm330, %v311
    %338 = vst.msk [vmem:[%s5 + $0x38] sm:$0xff] %vm330, %v313
    %339 = vst.msk [vmem:[%s5 + $0x40] sm:$0xff] %vm330, %v315
    %340 = vst.msk [vmem:[%s5 + $0x48] sm:$0xff] %vm330, %v317
    %341 = vst.msk [vmem:[%s5 + $0x50] sm:$0xff] %vm330, %v319
    %342 = vst.msk [vmem:[%s5 + $0x58] sm:$0xff] %vm330, %v321
    %343 = vst.msk [vmem:[%s5 + $0x60] sm:$0xff] %vm330, %v323
    %344 = vst.msk [vmem:[%s5 + $0x68] sm:$0xff] %vm330, %v325
    %345 = vst.msk [vmem:[%s5 + $0x70] sm:$0xff] %vm330, %v327
    %346 = vst.msk [vmem:[%s5 + $0x78] sm:$0xff] %vm330, %v329
    %v347 = vld [vmem:[%s3] sm:$0x1]
    %v349 = vlaneseq
    %v350 = vshrl.u32 %v349, 7
    %v351 = vsub.s32 0, %v350
    %v352 = vrot.slane %v347, %v351
    %v354 = vmul.f32 %v213, %v352
    %v355 = vmul.f32 %v216, %v352
    %v356 = vmul.f32 %v221, %v352
    %v357 = vmul.f32 %v224, %v352
    %v358 = vmul.f32 %v229, %v352
    %v359 = vmul.f32 %v232, %v352
    %v360 = vmul.f32 %v237, %v352
    %v361 = vmul.f32 %v240, %v352
    %v362 = vmul.f32 %v245, %v352
    %v363 = vmul.f32 %v248, %v352
    %v364 = vmul.f32 %v253, %v352
    %v365 = vmul.f32 %v256, %v352
    %v366 = vmul.f32 %v261, %v352
    %v367 = vmul.f32 %v264, %v352
    %v368 = vmul.f32 %v269, %v352
    %v369 = vmul.f32 %v272, %v352
    %370 = vadd.xlane.f32.xlu0 %v354
    %v371 = vpop.xlane.xlu0 %370
    %372 = vadd.xlane.f32.xlu0 %v355
    %v373 = vpop.xlane.xlu0 %372
    %374 = vadd.xlane.f32.xlu0 %v356
    %v375 = vpop.xlane.xlu0 %374
    %376 = vadd.xlane.f32.xlu0 %v357
    %v377 = vpop.xlane.xlu0 %376
    %378 = vadd.xlane.f32.xlu0 %v358
    %v379 = vpop.xlane.xlu0 %378
    %380 = vadd.xlane.f32.xlu0 %v359
    %v381 = vpop.xlane.xlu0 %380
    %382 = vadd.xlane.f32.xlu0 %v360
    %v383 = vpop.xlane.xlu0 %382
    %384 = vadd.xlane.f32.xlu0 %v361
    %v385 = vpop.xlane.xlu0 %384
    %386 = vadd.xlane.f32.xlu0 %v362
    %v387 = vpop.xlane.xlu0 %386
    %388 = vadd.xlane.f32.xlu0 %v363
    %v389 = vpop.xlane.xlu0 %388
    %390 = vadd.xlane.f32.xlu0 %v364
    %v391 = vpop.xlane.xlu0 %390
    %392 = vadd.xlane.f32.xlu0 %v365
    %v393 = vpop.xlane.xlu0 %392
    %394 = vadd.xlane.f32.xlu0 %v366
    %v395 = vpop.xlane.xlu0 %394
    %396 = vadd.xlane.f32.xlu0 %v367
    %v397 = vpop.xlane.xlu0 %396
    %398 = vadd.xlane.f32.xlu0 %v368
    %v399 = vpop.xlane.xlu0 %398
    %400 = vadd.xlane.f32.xlu0 %v369
    %v401 = vpop.xlane.xlu0 %400
    %402 = vst.msk [vmem:[%s6] sm:$0xff] %vm330, %v371
    %403 = vst.msk [vmem:[%s6 + $0x8] sm:$0xff] %vm330, %v373
    %404 = vst.msk [vmem:[%s6 + $0x10] sm:$0xff] %vm330, %v375
    %405 = vst.msk [vmem:[%s6 + $0x18] sm:$0xff] %vm330, %v377
    %406 = vst.msk [vmem:[%s6 + $0x20] sm:$0xff] %vm330, %v379
    %407 = vst.msk [vmem:[%s6 + $0x28] sm:$0xff] %vm330, %v381
    %408 = vst.msk [vmem:[%s6 + $0x30] sm:$0xff] %vm330, %v383
    %409 = vst.msk [vmem:[%s6 + $0x38] sm:$0xff] %vm330, %v385
    %410 = vst.msk [vmem:[%s6 + $0x40] sm:$0xff] %vm330, %v387
    %411 = vst.msk [vmem:[%s6 + $0x48] sm:$0xff] %vm330, %v389
    %412 = vst.msk [vmem:[%s6 + $0x50] sm:$0xff] %vm330, %v391
    %413 = vst.msk [vmem:[%s6 + $0x58] sm:$0xff] %vm330, %v393
    %414 = vst.msk [vmem:[%s6 + $0x60] sm:$0xff] %vm330, %v395
    %415 = vst.msk [vmem:[%s6 + $0x68] sm:$0xff] %vm330, %v397
    %416 = vst.msk [vmem:[%s6 + $0x70] sm:$0xff] %vm330, %v399
    %417 = vst.msk [vmem:[%s6 + $0x78] sm:$0xff] %vm330, %v401
    %v418 = vpack.c.bf16 %v216, %v213
    %v419 = vpack.c.bf16 %v224, %v221
    %v420 = vpack.c.bf16 %v232, %v229
    %v421 = vpack.c.bf16 %v240, %v237
    %v422 = vpack.c.bf16 %v248, %v245
    %v423 = vpack.c.bf16 %v256, %v253
    %v424 = vpack.c.bf16 %v264, %v261
    %v425 = vpack.c.bf16 %v272, %v269
    %v434 = vunpack.c.l.b16 %v418
    %v435 = vunpack.c.h.b16 %v418
    %v436 = vunpack.c.l.b16 %v419
    %v437 = vunpack.c.h.b16 %v419
    %v438 = vunpack.c.l.b16 %v420
    %v439 = vunpack.c.h.b16 %v420
    %v440 = vunpack.c.l.b16 %v421
    %v441 = vunpack.c.h.b16 %v421
    %v442 = vunpack.c.l.b16 %v422
    %v443 = vunpack.c.h.b16 %v422
    %v444 = vunpack.c.l.b16 %v423
    %v445 = vunpack.c.h.b16 %v423
    %v446 = vunpack.c.l.b16 %v424
    %v447 = vunpack.c.h.b16 %v424
    %v448 = vunpack.c.l.b16 %v425
    %v449 = vunpack.c.h.b16 %v425
    %v450 = vpack.c.b16 %v434, %v434
    %v451 = vpack.c.b16 %v435, %v435
    %v452 = vpack.c.b16 %v436, %v436
    %v453 = vpack.c.b16 %v437, %v437
    %v454 = vpack.c.b16 %v438, %v438
    %v455 = vpack.c.b16 %v439, %v439
    %v456 = vpack.c.b16 %v440, %v440
    %v457 = vpack.c.b16 %v441, %v441
    %v458 = vpack.c.b16 %v442, %v442
    %v459 = vpack.c.b16 %v443, %v443
    %v460 = vpack.c.b16 %v444, %v444
    %v461 = vpack.c.b16 %v445, %v445
    %v462 = vpack.c.b16 %v446, %v446
    %v463 = vpack.c.b16 %v447, %v447
    %v464 = vpack.c.b16 %v448, %v448
    %v465 = vpack.c.b16 %v449, %v449
    %482 = vst [vmem:[#allocation7] sm:$0xf] %v450
    %483 = vst [vmem:[#allocation7 + $0x4] sm:$0xf] %v451
    %484 = vst [vmem:[#allocation7 + $0x8] sm:$0xf] %v452
    %485 = vst [vmem:[#allocation7 + $0xc] sm:$0xf] %v453
    %486 = vst [vmem:[#allocation7 + $0x10] sm:$0xf] %v454
    %487 = vst [vmem:[#allocation7 + $0x14] sm:$0xf] %v455
    %488 = vst [vmem:[#allocation7 + $0x18] sm:$0xf] %v456
    %489 = vst [vmem:[#allocation7 + $0x1c] sm:$0xf] %v457
    %490 = vst [vmem:[#allocation7 + $0x20] sm:$0xf] %v458
    %491 = vst [vmem:[#allocation7 + $0x24] sm:$0xf] %v459
    %492 = vst [vmem:[#allocation7 + $0x28] sm:$0xf] %v460
    %493 = vst [vmem:[#allocation7 + $0x2c] sm:$0xf] %v461
    %494 = vst [vmem:[#allocation7 + $0x30] sm:$0xf] %v462
    %495 = vst [vmem:[#allocation7 + $0x34] sm:$0xf] %v463
    %496 = vst [vmem:[#allocation7 + $0x38] sm:$0xf] %v464
    %497 = vst [vmem:[#allocation7 + $0x3c] sm:$0xf] %v465
    // Predicated region
    $region26: #{tpu_custom_call.1} parent=1 // pred_check
      _
    $region27: #{tpu_custom_call.1} parent=1 // pred_check_branch
      %499 = sbr.rel (0) target = $region29
    $region28: #{tpu_custom_call.1} parent=1 // pred_region
      %s501 = ssub.s32 1024, 1024
      %502 = vsyncadd [#allocation4], %s501
      %s503 = sshll.u32 [#allocation7], 4
      %s504 = int_to_ptr.vmem [resolvable:$true] %s503
      %509 = dma.vmem_to_hbm [thread:$0]  %s504, 1024, %s4, [#allocation4], 64, 64, 4
    $region29: #{tpu_custom_call.1} parent=1 // pred_fallthru
      _
    // Predicated region
    $region30: #{tpu_custom_call.1} parent=1 // pred_check
      _
    $region31: #{tpu_custom_call.1} parent=1 // pred_check_branch
      %511 = sbr.rel (0) target = $region33
    $region32: #{tpu_custom_call.1} parent=1 // pred_region
      _
    $region33: #{tpu_custom_call.1} parent=1 // pred_fallthru
      _
    // Predicated region
    $region34: #{tpu_custom_call.1} parent=1 // pred_check
      _
    $region35: #{tpu_custom_call.1} parent=1 // pred_check_branch
      %513 = sbr.rel (0) target = $region37
    $region36: #{tpu_custom_call.1} parent=1 // pred_region
      _
    $region37: #{tpu_custom_call.1} parent=1 // pred_fallthru
      _
    // Predicated region
    $region38: #{tpu_custom_call.1} parent=1 // pred_check
      _
    $region39: #{tpu_custom_call.1} parent=1 // pred_check_branch
      %515 = sbr.rel (0) target = $region41
    $region40: #{tpu_custom_call.1} parent=1 // pred_region
      %516 = dma.done [#allocation4], 1024
    $region41: #{tpu_custom_call.1} parent=1 // pred_fallthru
      _
    // Predicated region
    $region42: #{tpu_custom_call.1} parent=1 // pred_check
      _
    $region43: #{tpu_custom_call.1} parent=1 // pred_check_branch
      %518 = sbr.rel (0) target = $region45
    $region44: #{tpu_custom_call.1} parent=1 // pred_region
      _
    $region45: #{tpu_custom_call.1} parent=1 // pred_fallthru
      _
    // Predicated region
    $region46: #{tpu_custom_call.1} parent=1 // pred_check
      _
    $region47: #{tpu_custom_call.1} parent=1 // pred_check_branch
      %520 = sbr.rel (0) target = $region49
    $region48: #{tpu_custom_call.1} parent=1 // pred_region
      _
    $region49: #{tpu_custom_call.1} parent=1 // pred_fallthru
      _
    %521 = vsyncpa [#allocation3], 1
    %522 = vsyncpa [#allocation6], 1
    %523 = vsyncpa [#allocation4], 1

</llo_original>
